<compile_context>
chip_gen: v6e
topology: v6e:2x2x1
jax: 0.10.0
libtpu: 0.0.40
codegen_flags: <defaults>
</compile_context>

<pallas_src>
import jax
import jax.numpy as jnp
from jax.experimental import pallas as pl
from jax.experimental.pallas import tpu as pltpu
import functools


def _class_decoder_kernel(x_ref, w_ref, b_ref, o_ref, *, approx_sigmoid):
    # (tbp, pack*S) @ (pack*S, pack*C) on the MXU, f32 accumulation.
    logits = jnp.dot(x_ref[...], w_ref[...], preferred_element_type=jnp.float32)
    logits = logits + b_ref[...]              # (tbp, pack*C) + (1, pack*C)
    if approx_sigmoid:
        # Clamp so exp(-logits) never overflows to inf before the approx
        # reciprocal; both exp and recip go to the (otherwise idle) EUP slot.
        z = jnp.exp(-jnp.maximum(logits, -30.0))
        probs = pl.reciprocal(1.0 + z, approx=True)
    else:
        probs = jax.nn.sigmoid(logits)
    o_ref[...] = probs.astype(o_ref.dtype)


def prepare_class_decoder_params(weight, bias, *, pack=16, dtype=None):
    """One-time parameter prep (analogue of module __init__).

    weight: (n_classes, state_size)
    bias:   (n_classes,)
    Returns:
      w_bd:     (pack*state_size, pack*n_classes) block-diagonal copies of W.T
      bias_row: (1, pack*n_classes) tiled bias
    Block j of w_bd multiplies original row 16r+j of the packed state row r,
    so (B, S) viewed as (B/pack, pack*S) times w_bd equals the per-row linear
    layer, with the result viewable back as (B, n_classes) for free.
    """
    w_t = weight.T
    if dtype is not None:
        w_t = w_t.astype(dtype)
    eye = jnp.eye(pack, dtype=w_t.dtype)
    w_bd = jnp.kron(eye, w_t)                                   # (pack*S, pack*C)
    bias_row = jnp.tile(bias.reshape(1, -1).astype(jnp.float32), (1, pack))
    return w_bd, bias_row


def class_decoder_forward(state, w_bd, bias_row, *,
                          tile_bytes=4 * 1024 * 1024,
                          approx_sigmoid=False,
                          min_pallas_batch=1024):
    """state: (B, state_size)  f32 or bf16
       w_bd:  (pack*state_size, pack*n_classes)  (from prepare_class_decoder_params)
       bias_row: (1, pack*n_classes) f32
       returns (B, n_classes) f32 = sigmoid(state @ weight.T + bias)
    """
    B, S = state.shape
    Kp, Np = w_bd.shape
    assert Kp % S == 0, "packed weight rows must be a multiple of state_size"
    pack = Kp // S
    assert Np % pack == 0
    C = Np // pack
    assert bias_row.shape == (1, Np)

    # Small-batch bypass: the pallas_call launch + HBM round trip of `state`
    # dominates the math at tiny B; let XLA fuse it instead.
    if B < min_pallas_batch:
        w_t = w_bd[:S, :C].astype(jnp.float32)
        b = bias_row[:, :C]
        return jax.nn.sigmoid(state.astype(jnp.float32) @ w_t + b)

    # Pad the batch to a multiple of `pack`, then view (B, S) as (Bp, pack*S).
    pad = (-B) % pack
    if pad:
        state = jnp.pad(state, ((0, pad), (0, 0)))
    b_padded = B + pad
    bp = b_padded // pack
    x = state.reshape(bp, Kp)                 # free row-major reshape

    # Packed-row tile from a byte budget (MiB-scale to amortize per-step cost).
    row_bytes = Kp * state.dtype.itemsize
    tbp = max(8, (tile_bytes // row_bytes) // 8 * 8)
    tbp = min(tbp, bp)                        # full-dim block if bp is small
    grid = (pl.cdiv(bp, tbp),)

    kernel = functools.partial(_class_decoder_kernel,
                               approx_sigmoid=approx_sigmoid)

    cost = pl.CostEstimate(
        flops=2 * bp * Kp * Np,
        transcendentals=bp * Np,
        bytes_accessed=(x.size * x.dtype.itemsize
                        + w_bd.size * w_bd.dtype.itemsize
                        + bp * Np * 4 + Np * 4),
    )

    out_packed = pl.pallas_call(
        kernel,
        out_shape=jax.ShapeDtypeStruct((bp, Np), jnp.float32),
        grid_spec=pltpu.PrefetchScalarGridSpec(
            num_scalar_prefetch=0,
            grid=grid,
            in_specs=[
                # state: lane-dense (tbp, 512) tiles, double-buffered.
                pl.BlockSpec((tbp, Kp), lambda i: (i, 0)),
                # weight / bias: constant block index -> resident in VMEM.
                pl.BlockSpec((Kp, Np), lambda i: (0, 0)),
                pl.BlockSpec((1, Np), lambda i: (0, 0)),
            ],
            out_specs=pl.BlockSpec((tbp, Np), lambda i: (i, 0)),
        ),
        compiler_params=pltpu.CompilerParams(
            dimension_semantics=("parallel",),
        ),
        cost_estimate=cost,
    )(x, w_bd, bias_row)

    out = out_packed.reshape(b_padded, C)     # free row-major reshape back
    if pad:
        out = out[:B]
    return out


if __name__ == "__main__":
    key = jax.random.PRNGKey(0)
    k_state, k_w, k_b, k_big = jax.random.split(key, 4)

    # Small shapes consistent with the module: state_size=32, n_classes=8.
    batch, state_size, n_classes = 2, 32, 8

    state = jax.random.normal(k_state, (batch, state_size), dtype=jnp.float32)
    bound = 1.0 / float(state_size) ** 0.5
    weight = jax.random.uniform(k_w, (n_classes, state_size), jnp.float32,
                                minval=-bound, maxval=bound)
    bias = jax.random.uniform(k_b, (n_classes,), jnp.float32,
                              minval=-bound, maxval=bound)

    w_bd, b_row = prepare_class_decoder_params(weight, bias)
    ref_small = jax.nn.sigmoid(state @ weight.T + bias)

    # 1) Small batch forced through the Pallas kernel (exercises the pad-to-16
    #    path and a single full-dim block), exact sigmoid for tight parity.
    out1 = jax.block_until_ready(
        class_decoder_forward(state, w_bd, b_row, min_pallas_batch=0))
    assert out1.shape == (batch, n_classes)
    assert jnp.allclose(out1, ref_small, atol=1e-5, rtol=1e-5)

    # 2) Small batch via the default bypass path.
    out2 = jax.block_until_ready(class_decoder_forward(state, w_bd, b_row))
    assert out2.shape == (batch, n_classes)
    assert jnp.allclose(out2, ref_small, atol=1e-5, rtol=1e-5)

    # 3) Larger batch with a small tile budget so grid > 1 (exercises the
    #    pipelined batch tiling and the resident packed weight/bias blocks).
    big_batch = 4096
    state_big = jax.random.normal(k_big, (big_batch, state_size), jnp.float32)
    ref_big = jax.nn.sigmoid(state_big @ weight.T + bias)
    out3 = jax.block_until_ready(
        class_decoder_forward(state_big, w_bd, b_row,
                              tile_bytes=128 * 1024, min_pallas_batch=0))
    assert out3.shape == (big_batch, n_classes)
    assert jnp.allclose(out3, ref_big, atol=1e-5, rtol=1e-5)

    # 4) Approx-sigmoid fast path (EUP exp + approx reciprocal): looser
    #    tolerance only because of the hardware reciprocal approximation.
    out4 = jax.block_until_ready(
        class_decoder_forward(state_big, w_bd, b_row,
                              tile_bytes=128 * 1024, min_pallas_batch=0,
                              approx_sigmoid=True))
    assert jnp.allclose(out4, ref_big, atol=5e-3)

    print("KERNEL_OK")
</pallas_src>

<mosaic_0001>
module attributes {stable_mosaic.version = 11 : i64} {
  func.func @_class_decoder_kernel(%arg0: i32, %arg1: memref<1x512xf32, #tpu.memory_space<vmem>>, %arg2: memref<512x128xf32, #tpu.memory_space<vmem>>, %arg3: memref<1x128xf32, #tpu.memory_space<vmem>>, %arg4: memref<1x128xf32, #tpu.memory_space<vmem>>) attributes {dimension_semantics = [#tpu.dimension_semantics<parallel>], iteration_bounds = array<i64: 1>, scalar_prefetch = 0 : i64, scratch_operands = 0 : i64, tpu.core_type = #tpu.core_type<tc>, window_params = [{transform_indices = @transform_0, window_bounds = array<i64: 1, 512>}, {pipeline_mode = #tpu.pipeline_mode<synchronous>, transform_indices = @transform_1, window_bounds = array<i64: 512, 128>}, {pipeline_mode = #tpu.pipeline_mode<synchronous>, transform_indices = @transform_2, window_bounds = array<i64: 1, 128>}, {transform_indices = @transform_3, window_bounds = array<i64: 1, 128>}]} {
    %c0 = arith.constant 0 : index
    %c0_0 = arith.constant 0 : index
    %0 = vector.load %arg1[%c0, %c0_0] : memref<1x512xf32, #tpu.memory_space<vmem>>, vector<1x512xf32>
    %c0_1 = arith.constant 0 : index
    %c0_2 = arith.constant 0 : index
    %1 = vector.load %arg2[%c0_1, %c0_2] : memref<512x128xf32, #tpu.memory_space<vmem>>, vector<512x128xf32>
    %cst = arith.constant dense<0.000000e+00> : vector<1x128xf32>
    %2 = tpu.matmul %0, %1, %cst {dimension_numbers = #tpu.dot_dimension_numbers<[1], [0], [0], [1], [0, 0, 1, 1], [], []>} : vector<1x512xf32>, vector<512x128xf32>, vector<1x128xf32> -> vector<1x128xf32>
    %c0_3 = arith.constant 0 : index
    %c0_4 = arith.constant 0 : index
    %3 = vector.load %arg3[%c0_3, %c0_4] : memref<1x128xf32, #tpu.memory_space<vmem>>, vector<1x128xf32>
    %4 = arith.addf %2, %3 : vector<1x128xf32>
    %5 = arith.negf %4 : vector<1x128xf32>
    %6 = math.exp %5 : vector<1x128xf32>
    %cst_5 = arith.constant 1.000000e+00 : f32
    %7 = vector.broadcast %cst_5 : f32 to vector<1x128xf32>
    %8 = arith.addf %7, %6 : vector<1x128xf32>
    %9 = arith.divf %7, %8 : vector<1x128xf32>
    %c0_6 = arith.constant 0 : index
    %c0_7 = arith.constant 0 : index
    %10 = vector.load %arg4[%c0_6, %c0_7] : memref<1x128xf32, #tpu.memory_space<vmem>>, vector<1x128xf32>
    tpu.vector_store %arg4[%c0_6, %c0_7], %9 {strides = array<i32>} : memref<1x128xf32, #tpu.memory_space<vmem>>, vector<1x128xf32>,
    return
  }
  func.func @transform_0(%arg0: i32) -> (i32, i32) {
    %c0_i32 = arith.constant 0 : i32
    %c0_i32_0 = arith.constant 0 : i32
    return %arg0, %c0_i32 : i32, i32
  }
  func.func @transform_1(%arg0: i32) -> (i32, i32) {
    %c0_i32 = arith.constant 0 : i32
    %c0_i32_0 = arith.constant 0 : i32
    %c0_i32_1 = arith.constant 0 : i32
    return %c0_i32, %c0_i32_0 : i32, i32
  }
  func.func @transform_2(%arg0: i32) -> (i32, i32) {
    %c0_i32 = arith.constant 0 : i32
    %c0_i32_0 = arith.constant 0 : i32
    %c0_i32_1 = arith.constant 0 : i32
    return %c0_i32, %c0_i32_0 : i32, i32
  }
  func.func @transform_3(%arg0: i32) -> (i32, i32) {
    %c0_i32 = arith.constant 0 : i32
    %c0_i32_0 = arith.constant 0 : i32
    return %arg0, %c0_i32 : i32, i32
  }
}

</mosaic_0001>

<llo_original>
// kernel: tpu_custom_call.1
$region0: #{tpu_custom_call.1}
  #allocation0 [shape = 'u32[]', space=smem, size = 0x4, offset = 0x4, fixed_abs, tag = 'smem constant byte address 0x4 - core index']
  #allocation1 [shape = 'u32[144,128]{1,0:T(1,128)}', space=vmem, size = 0x12000, scoped, tag = 'internal scratch']
  %s0 = inlined_call_operand.hbm [shape: f32[1,512], index: 0, kind: input, shape index: {}]
  %s1 = inlined_call_operand.hbm [shape: f32[512,128], index: 1, kind: input, shape index: {}]
  %s2 = inlined_call_operand.vmem [shape: f32[1,128], index: 2, kind: input, shape index: {}]
  %s3 = inlined_call_operand.hbm [shape: f32[1,128], index: 3, kind: output, shape index: {}]
  %s4 = sld [smem:[#allocation0]]
  $region30: #{tpu_custom_call.1} parent=0
    _
  %s6 = ssub.s32 1, %s4
  %s7 = scalar_select 0, %s6, %s4
  $region1: #{tpu_custom_call.1} parent=0
    #allocation2 [shape = 'u8[2048]{0}', space=vmem, size = 0x800, scoped, tag = 'input window, operand 0, single buffered']
    #allocation3 [shape = 's32[1]{0}', space=sflag, size = 0x4, scoped, tag = 'scoped memory for tpu_custom_call.1']
    #allocation4 [shape = 's32[1]{0}', space=sflag, size = 0x4, scoped, tag = 'scoped memory for tpu_custom_call.1']
    #allocation5 [shape = 'u8[262144]{0}', space=vmem, size = 0x40000, scoped, tag = 'input window, operand 1, single buffered']
    #allocation6 [shape = 's32[1]{0}', space=sflag, size = 0x4, scoped, tag = 'scoped memory for tpu_custom_call.1']
    #allocation7 [shape = 'u8[512]{0}', space=vmem, size = 0x400, scoped, tag = 'output window, operand 0, single buffered']
    %8 = vsyncpa [#allocation3], 0
    %9 = vsyncpa [#allocation6], 0
    %10 = vsyncpa [#allocation4], 0
    // Predicated region
    $region2: #{tpu_custom_call.1} parent=1 // pred_check
      _
    $region3: #{tpu_custom_call.1} parent=1 // pred_check_branch
      %12 = sbr.rel (0) target = $region5
    $region4: #{tpu_custom_call.1} parent=1 // pred_region
      %s14 = ssub.s32 64, 64
      %15 = vsyncadd [#allocation3], %s14
      %s17 = sshll.u32 [#allocation2], 4
      %s18 = int_to_ptr.vmem [resolvable:$true] %s17
      %20 = dma.hbm_to_vmem [thread:$0]  %s0, 64, %s18, [#allocation3]
    $region5: #{tpu_custom_call.1} parent=1 // pred_fallthru
      _
    // Predicated region
    $region6: #{tpu_custom_call.1} parent=1 // pred_check
      _
    $region7: #{tpu_custom_call.1} parent=1 // pred_check_branch
      %22 = sbr.rel (0) target = $region9
    $region8: #{tpu_custom_call.1} parent=1 // pred_region
      %s24 = ssub.s32 8192, 8192
      %25 = vsyncadd [#allocation6], %s24
      %s26 = sshll.u32 [#allocation5], 4
      %s27 = int_to_ptr.vmem [resolvable:$true] %s26
      %32 = dma.hbm_to_vmem [thread:$0]  %s1, 8192, %s27, [#allocation6], 128, 128, 8
    $region9: #{tpu_custom_call.1} parent=1 // pred_fallthru
      _
    // Predicated region
    $region10: #{tpu_custom_call.1} parent=1 // pred_check
      _
    $region11: #{tpu_custom_call.1} parent=1 // pred_check_branch
      %34 = sbr.rel (0) target = $region13
    $region12: #{tpu_custom_call.1} parent=1 // pred_region
      _
    $region13: #{tpu_custom_call.1} parent=1 // pred_fallthru
      _
    // Predicated region
    $region14: #{tpu_custom_call.1} parent=1 // pred_check
      _
    $region15: #{tpu_custom_call.1} parent=1 // pred_check_branch
      %36 = sbr.rel (0) target = $region17
    $region16: #{tpu_custom_call.1} parent=1 // pred_region
      %37 = dma.done [#allocation3], 64
    $region17: #{tpu_custom_call.1} parent=1 // pred_fallthru
      _
    // Predicated region
    $region18: #{tpu_custom_call.1} parent=1 // pred_check
      _
    $region19: #{tpu_custom_call.1} parent=1 // pred_check_branch
      %39 = sbr.rel (0) target = $region21
    $region20: #{tpu_custom_call.1} parent=1 // pred_region
      %40 = dma.done [#allocation6], 8192
    $region21: #{tpu_custom_call.1} parent=1 // pred_fallthru
      _
    %v41 = vld [vmem:[#allocation2] sm:$0xf]
    %v42 = vld [vmem:[#allocation5] sm:$0xff]
    %v43 = vld [vmem:[#allocation5 + $0x8] sm:$0xff]
    %v44 = vld [vmem:[#allocation5 + $0x10] sm:$0xff]
    %v45 = vld [vmem:[#allocation5 + $0x18] sm:$0xff]
    %v46 = vld [vmem:[#allocation5 + $0x20] sm:$0xff]
    %v47 = vld [vmem:[#allocation5 + $0x28] sm:$0xff]
    %v48 = vld [vmem:[#allocation5 + $0x30] sm:$0xff]
    %v49 = vld [vmem:[#allocation5 + $0x38] sm:$0xff]
    %v50 = vld [vmem:[#allocation5 + $0x40] sm:$0xff]
    %v51 = vld [vmem:[#allocation5 + $0x48] sm:$0xff]
    %v52 = vld [vmem:[#allocation5 + $0x50] sm:$0xff]
    %v53 = vld [vmem:[#allocation5 + $0x58] sm:$0xff]
    %v54 = vld [vmem:[#allocation5 + $0x60] sm:$0xff]
    %v55 = vld [vmem:[#allocation5 + $0x68] sm:$0xff]
    %v56 = vld [vmem:[#allocation5 + $0x70] sm:$0xff]
    %v57 = vld [vmem:[#allocation5 + $0x78] sm:$0xff]
    %v58 = vld [vmem:[#allocation5 + $0x80] sm:$0xff]
    %v59 = vld [vmem:[#allocation5 + $0x88] sm:$0xff]
    %v60 = vld [vmem:[#allocation5 + $0x90] sm:$0xff]
    %v61 = vld [vmem:[#allocation5 + $0x98] sm:$0xff]
    %v62 = vld [vmem:[#allocation5 + $0xa0] sm:$0xff]
    %v63 = vld [vmem:[#allocation5 + $0xa8] sm:$0xff]
    %v64 = vld [vmem:[#allocation5 + $0xb0] sm:$0xff]
    %v65 = vld [vmem:[#allocation5 + $0xb8] sm:$0xff]
    %v66 = vld [vmem:[#allocation5 + $0xc0] sm:$0xff]
    %v67 = vld [vmem:[#allocation5 + $0xc8] sm:$0xff]
    %v68 = vld [vmem:[#allocation5 + $0xd0] sm:$0xff]
    %v69 = vld [vmem:[#allocation5 + $0xd8] sm:$0xff]
    %v70 = vld [vmem:[#allocation5 + $0xe0] sm:$0xff]
    %v71 = vld [vmem:[#allocation5 + $0xe8] sm:$0xff]
    %v72 = vld [vmem:[#allocation5 + $0xf0] sm:$0xff]
    %v73 = vld [vmem:[#allocation5 + $0xf8] sm:$0xff]
    %v74 = vld [vmem:[#allocation5 + $0x100] sm:$0xff]
    %v75 = vld [vmem:[#allocation5 + $0x108] sm:$0xff]
    %v76 = vld [vmem:[#allocation5 + $0x110] sm:$0xff]
    %v77 = vld [vmem:[#allocation5 + $0x118] sm:$0xff]
    %v78 = vld [vmem:[#allocation5 + $0x120] sm:$0xff]
    %v79 = vld [vmem:[#allocation5 + $0x128] sm:$0xff]
    %v80 = vld [vmem:[#allocation5 + $0x130] sm:$0xff]
    %v81 = vld [vmem:[#allocation5 + $0x138] sm:$0xff]
    %v82 = vld [vmem:[#allocation5 + $0x140] sm:$0xff]
    %v83 = vld [vmem:[#allocation5 + $0x148] sm:$0xff]
    %v84 = vld [vmem:[#allocation5 + $0x150] sm:$0xff]
    %v85 = vld [vmem:[#allocation5 + $0x158] sm:$0xff]
    %v86 = vld [vmem:[#allocation5 + $0x160] sm:$0xff]
    %v87 = vld [vmem:[#allocation5 + $0x168] sm:$0xff]
    %v88 = vld [vmem:[#allocation5 + $0x170] sm:$0xff]
    %v89 = vld [vmem:[#allocation5 + $0x178] sm:$0xff]
    %v90 = vld [vmem:[#allocation5 + $0x180] sm:$0xff]
    %v91 = vld [vmem:[#allocation5 + $0x188] sm:$0xff]
    %v92 = vld [vmem:[#allocation5 + $0x190] sm:$0xff]
    %v93 = vld [vmem:[#allocation5 + $0x198] sm:$0xff]
    %v94 = vld [vmem:[#allocation5 + $0x1a0] sm:$0xff]
    %v95 = vld [vmem:[#allocation5 + $0x1a8] sm:$0xff]
    %v96 = vld [vmem:[#allocation5 + $0x1b0] sm:$0xff]
    %v97 = vld [vmem:[#allocation5 + $0x1b8] sm:$0xff]
    %v98 = vld [vmem:[#allocation5 + $0x1c0] sm:$0xff]
    %v99 = vld [vmem:[#allocation5 + $0x1c8] sm:$0xff]
    %v100 = vld [vmem:[#allocation5 + $0x1d0] sm:$0xff]
    %v101 = vld [vmem:[#allocation5 + $0x1d8] sm:$0xff]
    %v102 = vld [vmem:[#allocation5 + $0x1e0] sm:$0xff]
    %v103 = vld [vmem:[#allocation5 + $0x1e8] sm:$0xff]
    %v104 = vld [vmem:[#allocation5 + $0x1f0] sm:$0xff]
    %v105 = vld [vmem:[#allocation5 + $0x1f8] sm:$0xff]
    %v106 = vld [vmem:[%s2] sm:$0x1]
    %v108 = vlaneseq
    %v109 = vshrl.u32 %v108, 7
    %v110 = vsub.s32 0, %v109
    %v111 = vrot.slane %v41, %v110
    %v112 = vlaneseq
    %v113 = vshrl.u32 %v112, 7
    %v114 = vsub.s32 1, %v113
    %v115 = vrot.slane %v41, %v114
    %v116 = vlaneseq
    %v117 = vshrl.u32 %v116, 7
    %v118 = vsub.s32 2, %v117
    %v119 = vrot.slane %v41, %v118
    %v120 = vlaneseq
    %v121 = vshrl.u32 %v120, 7
    %v122 = vsub.s32 3, %v121
    %v123 = vrot.slane %v41, %v122
    %128 = vmatprep.subr.mxu0 0.0
    %129 = vmatpush1.msra.mxu0 %v57
    %130 = vmatprep.subr.mxu0 0.0
    %131 = vmatpush1.msra.mxu0 %v56
    %132 = vmatprep.subr.mxu0 0.0
    %133 = vmatpush1.msra.mxu0 %v55
    %134 = vmatprep.subr.mxu0 0.0
    %135 = vmatpush1.msra.mxu0 %v54
    %136 = vmatprep.subr.mxu0 0.0
    %137 = vmatpush1.msra.mxu0 %v53
    %138 = vmatprep.subr.mxu0 0.0
    %139 = vmatpush1.msra.mxu0 %v52
    %140 = vmatprep.subr.mxu0 0.0
    %141 = vmatpush1.msra.mxu0 %v51
    %142 = vmatprep.subr.mxu0 0.0
    %143 = vmatpush1.msra.mxu0 %v50
    %144 = vmatprep.subr.mxu0 0.0
    %145 = vmatpush1.msra.mxu0 %v49
    %146 = vmatprep.subr.mxu0 0.0
    %147 = vmatpush1.msra.mxu0 %v48
    %148 = vmatprep.subr.mxu0 0.0
    %149 = vmatpush1.msra.mxu0 %v47
    %150 = vmatprep.subr.mxu0 0.0
    %151 = vmatpush1.msra.mxu0 %v46
    %152 = vmatprep.subr.mxu0 0.0
    %153 = vmatpush1.msra.mxu0 %v45
    %154 = vmatprep.subr.mxu0 0.0
    %155 = vmatpush1.msra.mxu0 %v44
    %156 = vmatprep.subr.mxu0 0.0
    %157 = vmatpush1.msra.mxu0 %v43
    %158 = vmatprep.subr.mxu0 0.0
    %159 = vmatpush1.msra.mxu0 %v42
    %160 = vmatprep.subr.mxu0 0.0
    %161 = vmatpush2.msra.mxu0 %v73
    %162 = vmatprep.subr.mxu0 0.0
    %163 = vmatpush2.msra.mxu0 %v72
    %164 = vmatprep.subr.mxu0 0.0
    %165 = vmatpush2.msra.mxu0 %v71
    %166 = vmatprep.subr.mxu0 0.0
    %167 = vmatpush2.msra.mxu0 %v70
    %168 = vmatprep.subr.mxu0 0.0
    %169 = vmatpush2.msra.mxu0 %v69
    %170 = vmatprep.subr.mxu0 0.0
    %171 = vmatpush2.msra.mxu0 %v68
    %172 = vmatprep.subr.mxu0 0.0
    %173 = vmatpush2.msra.mxu0 %v67
    %174 = vmatprep.subr.mxu0 0.0
    %175 = vmatpush2.msra.mxu0 %v66
    %176 = vmatprep.subr.mxu0 0.0
    %177 = vmatpush2.msra.mxu0 %v65
    %178 = vmatprep.subr.mxu0 0.0
    %179 = vmatpush2.msra.mxu0 %v64
    %180 = vmatprep.subr.mxu0 0.0
    %181 = vmatpush2.msra.mxu0 %v63
    %182 = vmatprep.subr.mxu0 0.0
    %183 = vmatpush2.msra.mxu0 %v62
    %184 = vmatprep.subr.mxu0 0.0
    %185 = vmatpush2.msra.mxu0 %v61
    %186 = vmatprep.subr.mxu0 0.0
    %187 = vmatpush2.msra.mxu0 %v60
    %188 = vmatprep.subr.mxu0 0.0
    %189 = vmatpush2.msra.mxu0 %v59
    %190 = vmatprep.subr.mxu0 0.0
    %191 = vmatpush2.msra.mxu0 %v58
    %192 = vmatprep.mubr.f32.mxu0 %v115
    %193 = vmatmul.mubr.f32.gmra.mxu0 %v111
    %v194 = vpop.f32.mrf.mxu0
    %v195 = vadd.f32 %v106, %v194
    %v196 = vpop.f32.mrf.mxu0
    %197 = vdwg.mxu0
    %198 = vmatprep.subr.mxu0 0.0
    %199 = vmatpush1.msra.mxu0 %v89
    %200 = vmatprep.subr.mxu0 0.0
    %201 = vmatpush1.msra.mxu0 %v88
    %202 = vmatprep.subr.mxu0 0.0
    %203 = vmatpush1.msra.mxu0 %v87
    %204 = vmatprep.subr.mxu0 0.0
    %205 = vmatpush1.msra.mxu0 %v86
    %206 = vmatprep.subr.mxu0 0.0
    %207 = vmatpush1.msra.mxu0 %v85
    %208 = vmatprep.subr.mxu0 0.0
    %209 = vmatpush1.msra.mxu0 %v84
    %210 = vmatprep.subr.mxu0 0.0
    %211 = vmatpush1.msra.mxu0 %v83
    %212 = vmatprep.subr.mxu0 0.0
    %213 = vmatpush1.msra.mxu0 %v82
    %214 = vmatprep.subr.mxu0 0.0
    %215 = vmatpush1.msra.mxu0 %v81
    %216 = vmatprep.subr.mxu0 0.0
    %217 = vmatpush1.msra.mxu0 %v80
    %218 = vmatprep.subr.mxu0 0.0
    %219 = vmatpush1.msra.mxu0 %v79
    %220 = vmatprep.subr.mxu0 0.0
    %221 = vmatpush1.msra.mxu0 %v78
    %222 = vmatprep.subr.mxu0 0.0
    %223 = vmatpush1.msra.mxu0 %v77
    %224 = vmatprep.subr.mxu0 0.0
    %225 = vmatpush1.msra.mxu0 %v76
    %226 = vmatprep.subr.mxu0 0.0
    %227 = vmatpush1.msra.mxu0 %v75
    %228 = vmatprep.subr.mxu0 0.0
    %229 = vmatpush1.msra.mxu0 %v74
    %230 = vmatprep.subr.mxu0 0.0
    %231 = vmatpush2.msra.mxu0 %v105
    %232 = vmatprep.subr.mxu0 0.0
    %233 = vmatpush2.msra.mxu0 %v104
    %234 = vmatprep.subr.mxu0 0.0
    %235 = vmatpush2.msra.mxu0 %v103
    %236 = vmatprep.subr.mxu0 0.0
    %237 = vmatpush2.msra.mxu0 %v102
    %238 = vmatprep.subr.mxu0 0.0
    %239 = vmatpush2.msra.mxu0 %v101
    %240 = vmatprep.subr.mxu0 0.0
    %241 = vmatpush2.msra.mxu0 %v100
    %242 = vmatprep.subr.mxu0 0.0
    %243 = vmatpush2.msra.mxu0 %v99
    %244 = vmatprep.subr.mxu0 0.0
    %245 = vmatpush2.msra.mxu0 %v98
    %246 = vmatprep.subr.mxu0 0.0
    %247 = vmatpush2.msra.mxu0 %v97
    %248 = vmatprep.subr.mxu0 0.0
    %249 = vmatpush2.msra.mxu0 %v96
    %250 = vmatprep.subr.mxu0 0.0
    %251 = vmatpush2.msra.mxu0 %v95
    %252 = vmatprep.subr.mxu0 0.0
    %253 = vmatpush2.msra.mxu0 %v94
    %254 = vmatprep.subr.mxu0 0.0
    %255 = vmatpush2.msra.mxu0 %v93
    %256 = vmatprep.subr.mxu0 0.0
    %257 = vmatpush2.msra.mxu0 %v92
    %258 = vmatprep.subr.mxu0 0.0
    %259 = vmatpush2.msra.mxu0 %v91
    %260 = vmatprep.subr.mxu0 0.0
    %261 = vmatpush2.msra.mxu0 %v90
    %262 = vmatprep.mubr.f32.mxu0 %v123
    %263 = vmatmul.mubr.f32.gmra.mxu0 %v119
    %v264 = vpop.f32.mrf.mxu0
    %v265 = vadd.f32 %v195, %v264
    %v266 = vpop.f32.mrf.mxu0
    %267 = vdwg.mxu0
    %v268 = vxor.u32 %v265, 2147483648
    %v269 = vmul.f32 %v268, 1.442695
    %v270 = vpow.pop %v269
    %v271 = vadd.f32 %v270, 1.0
    %v272 = vrcp.pop %v271
    %v273 = vmul.f32 1.0, %v272
    %274 = vst [vmem:[#allocation7] sm:$0x1] %v273
    // Predicated region
    $region22: #{tpu_custom_call.1} parent=1 // pred_check
      _
    $region23: #{tpu_custom_call.1} parent=1 // pred_check_branch
      %276 = sbr.rel (0) target = $region25
    $region24: #{tpu_custom_call.1} parent=1 // pred_region
      %s278 = ssub.s32 16, 16
      %279 = vsyncadd [#allocation4], %s278
      %s281 = sshll.u32 [#allocation7], 4
      %s282 = int_to_ptr.vmem [resolvable:$true] %s281
      %284 = dma.vmem_to_hbm [thread:$0]  %s282, 16, %s3, [#allocation4]
    $region25: #{tpu_custom_call.1} parent=1 // pred_fallthru
      _
    // Predicated region
    $region26: #{tpu_custom_call.1} parent=1 // pred_check
      _
    $region27: #{tpu_custom_call.1} parent=1 // pred_check_branch
      %286 = sbr.rel (0) target = $region29
    $region28: #{tpu_custom_call.1} parent=1 // pred_region
      %287 = dma.done [#allocation4], 16
    $region29: #{tpu_custom_call.1} parent=1 // pred_fallthru
      _
    %288 = vsyncpa [#allocation3], 1
    %289 = vsyncpa [#allocation6], 1
    %290 = vsyncpa [#allocation4], 1

</llo_original>
